<compile_context>
chip_gen: v6e
topology: v6e:2x2x1
jax: 0.10.0
libtpu: 0.0.40
codegen_flags: <defaults>
</compile_context>

<pallas_src>
import jax
import jax.numpy as jnp
from jax import lax
from jax.experimental import pallas as pl
from jax.experimental.pallas import tpu as pltpu

DIM = 32               # self.dim (input feature size)
H1, H2, H3 = 20, 5, 1  # layer1 -> 20, layer2 -> 5, layer3 -> 1
LEAKY_SLOPE = 0.01     # nn.LeakyReLU() default negative_slope
TILE_N_MAX = 16384     # rows of the [N, D] input per grid step (~2 MiB f32)


def _mlp_kernel(x_ref, w1t_ref, b1t_ref, w23t_ref, b23_ref, o_ref):
    # x_ref: [T, DIM] tile of the un-transposed input.
    # layer1 as W1^T contracted against x's feature axis -> [H1, T]; the batch
    # axis sits on the 128-lane dimension so everything downstream (and the
    # output store) is lane-dense.
    h1 = lax.dot_general(
        w1t_ref[...], x_ref[...],
        dimension_numbers=(((1,), (1,)), ((), ())),
        preferred_element_type=jnp.float32)                 # [H1, T]
    h1 = h1 + b1t_ref[...]                                  # [H1, 1] broadcast
    h1 = jnp.where(h1 > 0, h1, LEAKY_SLOPE * h1)            # LeakyReLU
    # layer2 + layer3 folded into a single linear map (no activation between).
    h = jnp.dot(w23t_ref[...], h1, preferred_element_type=jnp.float32)  # [1, T]
    h = h + b23_ref[...]                                    # [1, 1] broadcast
    o_ref[...] = jax.nn.sigmoid(h)                          # lane-dense store


def _round_up(v, m):
    return ((v + m - 1) // m) * m


def kernel_only_forward(x, params):
    """x: [batch, seq, dim] float32 -> [batch, seq] float32 (squeezed last dim)."""
    batch, seq, dim = x.shape
    assert dim == DIM
    n = batch * seq

    w1, b1, w2, b2, w3, b3 = params          # weights [in, out], biases [1, out]
    # Fold the activation-free layer2 @ layer3 pair once, outside the kernel.
    w23 = w2 @ w3                            # [20, 1]
    b23 = b2 @ w3 + b3                       # [1, 1]
    w1t = jnp.asarray(w1.T)                  # [20, 32]
    b1t = jnp.asarray(b1.T)                  # [20, 1]
    w23t = jnp.asarray(w23.T)                # [1, 20]

    # Tile selection: big tiles to amortize per-step overhead, at least ~8 grid
    # steps for large n (v7x megacore), 128-row aligned, capped for VMEM.
    tile_n = max(128, min(TILE_N_MAX, _round_up(pl.cdiv(n, 8), 128)))
    grid_n = pl.cdiv(n, tile_n)              # ragged last block: no jnp.pad

    x2d = x.reshape(n, dim)                  # free reshape; NO transpose / pad

    cost = pl.CostEstimate(
        flops=2 * n * (DIM * H1 + H1 * H3) + 6 * n * H1,
        transcendentals=n,                                   # sigmoid exp
        bytes_accessed=n * (DIM + 1) * 4 + (DIM * H1 + H1) * 4,
    )

    out = pl.pallas_call(
        _mlp_kernel,
        out_shape=jax.ShapeDtypeStruct((1, n), jnp.float32),
        grid=(grid_n,),
        in_specs=[
            pl.BlockSpec((tile_n, DIM), lambda i: (i, 0)),   # streamed x tile
            pl.BlockSpec((H1, DIM), lambda i: (0, 0)),       # W1^T   (resident)
            pl.BlockSpec((H1, 1), lambda i: (0, 0)),         # b1     (resident)
            pl.BlockSpec((1, H1), lambda i: (0, 0)),         # W23^T  (resident)
            pl.BlockSpec((1, 1), lambda i: (0, 0)),          # b23    (resident)
        ],
        out_specs=pl.BlockSpec((1, tile_n), lambda i: (0, i)),
        compiler_params=pltpu.CompilerParams(
            dimension_semantics=("parallel",),               # megacore sharding
            vmem_limit_bytes=32 * 1024 * 1024),              # safe on v5e/v6e/v7x
        cost_estimate=cost,
    )(x2d, w1t, b1t, w23t, b23)

    # squeeze() in the reference removes the size-1 last dim -> [batch, seq]
    return out[0].reshape(batch, seq)


def init_params(key):
    """Kaiming-normal (leaky_relu gain) weights, zero biases, deterministic."""
    def kaiming(key, fan_in, fan_out):
        gain = jnp.sqrt(2.0 / (1.0 + LEAKY_SLOPE ** 2))
        std = gain / jnp.sqrt(jnp.asarray(fan_in, jnp.float32))
        # stored as [in, out] so the reference does x @ W
        return std * jax.random.normal(key, (fan_in, fan_out), dtype=jnp.float32)

    k1, k2, k3 = jax.random.split(key, 3)
    w1 = kaiming(k1, DIM, H1)
    b1 = jnp.zeros((1, H1), jnp.float32)
    w2 = kaiming(k2, H1, H2)
    b2 = jnp.zeros((1, H2), jnp.float32)
    w3 = kaiming(k3, H2, H3)
    b3 = jnp.zeros((1, H3), jnp.float32)
    return (w1, b1, w2, b2, w3, b3)


def reference_forward(x, params):
    """Pure-JAX reference of kernel_only.forward (unfolded) for correctness."""
    w1, b1, w2, b2, w3, b3 = params
    h1 = x @ w1 + b1[0]
    h1 = jnp.where(h1 > 0, h1, LEAKY_SLOPE * h1)
    h2 = h1 @ w2 + b2[0]
    h3 = h2 @ w3 + b3[0]
    return jax.nn.sigmoid(h3)[..., 0]


if __name__ == "__main__":
    key = jax.random.PRNGKey(0)
    kx, kx2, kp = jax.random.split(key, 3)
    params = init_params(kp)

    # Primary small-shape check (module-consistent shapes).
    batch, seq = 2, 8
    x = jax.random.normal(kx, (batch, seq, DIM), dtype=jnp.float32)
    out = jax.block_until_ready(kernel_only_forward(x, params))
    ref = reference_forward(x, params)
    assert out.shape == (batch, seq), out.shape
    assert jnp.allclose(out, ref, atol=1e-5, rtol=1e-5), (
        float(jnp.max(jnp.abs(out - ref))))

    # Secondary check exercising a multi-step grid with a ragged last block.
    batch2, seq2 = 2, 1000
    x2 = jax.random.normal(kx2, (batch2, seq2, DIM), dtype=jnp.float32)
    out2 = jax.block_until_ready(kernel_only_forward(x2, params))
    ref2 = reference_forward(x2, params)
    assert out2.shape == (batch2, seq2), out2.shape
    assert jnp.allclose(out2, ref2, atol=1e-5, rtol=1e-5), (
        float(jnp.max(jnp.abs(out2 - ref2))))

    print("KERNEL_OK")
</pallas_src>

<mosaic_0001>
module attributes {stable_mosaic.version = 11 : i64} {
  func.func @_mlp_kernel(%arg0: i32, %arg1: memref<128x32xf32, #tpu.memory_space<vmem>>, %arg2: memref<20x32xf32, #tpu.memory_space<vmem>>, %arg3: memref<20x1xf32, #tpu.memory_space<vmem>>, %arg4: memref<1x20xf32, #tpu.memory_space<vmem>>, %arg5: memref<1x1xf32, #tpu.memory_space<vmem>>, %arg6: memref<1x128xf32, #tpu.memory_space<vmem>>) attributes {dimension_semantics = [#tpu.dimension_semantics<parallel>], iteration_bounds = array<i64: 1>, scalar_prefetch = 0 : i64, scratch_operands = 0 : i64, tpu.core_type = #tpu.core_type<tc>, window_params = [{transform_indices = @transform_0, window_bounds = array<i64: 128, 32>}, {pipeline_mode = #tpu.pipeline_mode<synchronous>, transform_indices = @transform_1, window_bounds = array<i64: 20, 32>}, {pipeline_mode = #tpu.pipeline_mode<synchronous>, transform_indices = @transform_2, window_bounds = array<i64: 20, 1>}, {pipeline_mode = #tpu.pipeline_mode<synchronous>, transform_indices = @transform_3, window_bounds = array<i64: 1, 20>}, {pipeline_mode = #tpu.pipeline_mode<synchronous>, transform_indices = @transform_4, window_bounds = array<i64: 1, 1>}, {transform_indices = @transform_5, window_bounds = array<i64: 1, 128>}]} {
    %c0 = arith.constant 0 : index
    %c0_0 = arith.constant 0 : index
    %0 = vector.load %arg2[%c0, %c0_0] : memref<20x32xf32, #tpu.memory_space<vmem>>, vector<20x32xf32>
    %c0_1 = arith.constant 0 : index
    %c0_2 = arith.constant 0 : index
    %1 = vector.load %arg1[%c0_1, %c0_2] : memref<128x32xf32, #tpu.memory_space<vmem>>, vector<128x32xf32>
    %cst = arith.constant dense<0.000000e+00> : vector<20x128xf32>
    %2 = tpu.matmul %0, %1, %cst {dimension_numbers = #tpu.dot_dimension_numbers<[1], [1], [0], [0], [0, 0, 1, 0], [], []>} : vector<20x32xf32>, vector<128x32xf32>, vector<20x128xf32> -> vector<20x128xf32>
    %c0_3 = arith.constant 0 : index
    %c0_4 = arith.constant 0 : index
    %3 = vector.load %arg3[%c0_3, %c0_4] : memref<20x1xf32, #tpu.memory_space<vmem>>, vector<20x1xf32>
    %4 = vector.broadcast %3 : vector<20x1xf32> to vector<20x128xf32>
    %5 = arith.addf %2, %4 : vector<20x128xf32>
    %cst_5 = arith.constant 0.000000e+00 : f32
    %6 = vector.broadcast %cst_5 : f32 to vector<20x128xf32>
    %7 = arith.cmpf ogt, %5, %6 : vector<20x128xf32>
    %cst_6 = arith.constant 0.00999999977 : f32
    %8 = vector.broadcast %cst_6 : f32 to vector<20x128xf32>
    %9 = arith.mulf %8, %5 : vector<20x128xf32>
    %10 = arith.select %7, %5, %9 : vector<20x128xi1>, vector<20x128xf32>
    %c0_7 = arith.constant 0 : index
    %c0_8 = arith.constant 0 : index
    %11 = vector.load %arg4[%c0_7, %c0_8] : memref<1x20xf32, #tpu.memory_space<vmem>>, vector<1x20xf32>
    %cst_9 = arith.constant dense<0.000000e+00> : vector<1x128xf32>
    %12 = tpu.matmul %11, %10, %cst_9 {dimension_numbers = #tpu.dot_dimension_numbers<[1], [0], [0], [1], [0, 0, 1, 1], [], []>} : vector<1x20xf32>, vector<20x128xf32>, vector<1x128xf32> -> vector<1x128xf32>
    %c0_10 = arith.constant 0 : index
    %c0_11 = arith.constant 0 : index
    %13 = vector.load %arg5[%c0_10, %c0_11] : memref<1x1xf32, #tpu.memory_space<vmem>>, vector<1x1xf32>
    %14 = vector.broadcast %13 : vector<1x1xf32> to vector<1x128xf32>
    %15 = arith.addf %12, %14 : vector<1x128xf32>
    %16 = arith.negf %15 : vector<1x128xf32>
    %17 = math.exp %16 : vector<1x128xf32>
    %cst_12 = arith.constant 1.000000e+00 : f32
    %18 = vector.broadcast %cst_12 : f32 to vector<1x128xf32>
    %19 = arith.addf %18, %17 : vector<1x128xf32>
    %20 = arith.divf %18, %19 : vector<1x128xf32>
    %c0_13 = arith.constant 0 : index
    %c0_14 = arith.constant 0 : index
    %21 = vector.load %arg6[%c0_13, %c0_14] : memref<1x128xf32, #tpu.memory_space<vmem>>, vector<1x128xf32>
    tpu.vector_store %arg6[%c0_13, %c0_14], %20 {strides = array<i32>} : memref<1x128xf32, #tpu.memory_space<vmem>>, vector<1x128xf32>,
    return
  }
  func.func @transform_0(%arg0: i32) -> (i32, i32) {
    %c0_i32 = arith.constant 0 : i32
    %c0_i32_0 = arith.constant 0 : i32
    return %arg0, %c0_i32 : i32, i32
  }
  func.func @transform_1(%arg0: i32) -> (i32, i32) {
    %c0_i32 = arith.constant 0 : i32
    %c0_i32_0 = arith.constant 0 : i32
    %c0_i32_1 = arith.constant 0 : i32
    return %c0_i32, %c0_i32_0 : i32, i32
  }
  func.func @transform_2(%arg0: i32) -> (i32, i32) {
    %c0_i32 = arith.constant 0 : i32
    %c0_i32_0 = arith.constant 0 : i32
    %c0_i32_1 = arith.constant 0 : i32
    return %c0_i32, %c0_i32_0 : i32, i32
  }
  func.func @transform_3(%arg0: i32) -> (i32, i32) {
    %c0_i32 = arith.constant 0 : i32
    %c0_i32_0 = arith.constant 0 : i32
    %c0_i32_1 = arith.constant 0 : i32
    return %c0_i32, %c0_i32_0 : i32, i32
  }
  func.func @transform_4(%arg0: i32) -> (i32, i32) {
    %c0_i32 = arith.constant 0 : i32
    %c0_i32_0 = arith.constant 0 : i32
    %c0_i32_1 = arith.constant 0 : i32
    return %c0_i32, %c0_i32_0 : i32, i32
  }
  func.func @transform_5(%arg0: i32) -> (i32, i32) {
    %c0_i32 = arith.constant 0 : i32
    %c0_i32_0 = arith.constant 0 : i32
    return %c0_i32, %arg0 : i32, i32
  }
}

</mosaic_0001>

<llo_original>
// kernel: tpu_custom_call.1
$region0: #{tpu_custom_call.1}
  #allocation0 [shape = 'u32[]', space=smem, size = 0x4, offset = 0x4, fixed_abs, tag = 'smem constant byte address 0x4 - core index']
  #allocation1 [shape = 'u32[144,128]{1,0:T(1,128)}', space=vmem, size = 0x12000, scoped, tag = 'internal scratch']
  #allocation2 [shape = 'f32[1,1]{1,0:T(1,128)S(1)}', space=vmem, size = 0x200, scoped, tag = 'scoped memory for tpu_custom_call.1']
  %s0 = inlined_call_operand.hbm [shape: f32[16,32], index: 0, kind: input, shape index: {}]
  %s1 = inlined_call_operand.vmem [shape: f32[20,32], index: 1, kind: input, shape index: {}]
  %s2 = inlined_call_operand.vmem [shape: f32[20,1], index: 2, kind: input, shape index: {}]
  %s3 = inlined_call_operand.vmem [shape: f32[1,20], index: 3, kind: input, shape index: {}]
  %s4 = inlined_call_operand.<no memory space> [shape: f32[1,1], index: 4, kind: input, shape index: {}]
  %s5 = inlined_call_operand.hbm [shape: f32[1,16], index: 5, kind: output, shape index: {}]
  %s6 = sld [smem:[#allocation0]]
  $region34: #{tpu_custom_call.1} parent=0
    _
  %s8 = ssub.s32 1, %s6
  %s9 = scalar_select 0, %s8, %s6
  %v10 = vstv %s4
  %11 = vst [vmem:[#allocation2] sm:$0x1] %v10
  $region1: #{tpu_custom_call.1} parent=0
    #allocation3 [shape = 'u8[65536]{0}', space=vmem, size = 0x10000, scoped, tag = 'input window, operand 0, single buffered']
    #allocation4 [shape = 's32[1]{0}', space=sflag, size = 0x4, scoped, tag = 'scoped memory for tpu_custom_call.1']
    #allocation5 [shape = 's32[1]{0}', space=sflag, size = 0x4, scoped, tag = 'scoped memory for tpu_custom_call.1']
    #allocation6 [shape = 'u8[512]{0}', space=vmem, size = 0x400, scoped, tag = 'output window, operand 0, single buffered']
    %12 = vsyncpa [#allocation4], 0
    %13 = vsyncpa [#allocation5], 0
    // Predicated region
    $region2: #{tpu_custom_call.1} parent=1 // pred_check
      _
    $region3: #{tpu_custom_call.1} parent=1 // pred_check_branch
      %15 = sbr.rel (0) target = $region5
    $region4: #{tpu_custom_call.1} parent=1 // pred_region
      %s17 = ssub.s32 2048, 256
      %18 = vsyncadd [#allocation4], %s17
      %s19 = sshll.u32 [#allocation3], 4
      %s20 = int_to_ptr.vmem [resolvable:$true] %s19
      %25 = dma.hbm_to_vmem [thread:$0]  %s0, 256, %s20, [#allocation4], 128, 128, 8
    $region5: #{tpu_custom_call.1} parent=1 // pred_fallthru
      _
    // Predicated region
    $region6: #{tpu_custom_call.1} parent=1 // pred_check
      _
    $region7: #{tpu_custom_call.1} parent=1 // pred_check_branch
      %27 = sbr.rel (0) target = $region9
    $region8: #{tpu_custom_call.1} parent=1 // pred_region
      _
    $region9: #{tpu_custom_call.1} parent=1 // pred_fallthru
      _
    // Predicated region
    $region10: #{tpu_custom_call.1} parent=1 // pred_check
      _
    $region11: #{tpu_custom_call.1} parent=1 // pred_check_branch
      %29 = sbr.rel (0) target = $region13
    $region12: #{tpu_custom_call.1} parent=1 // pred_region
      _
    $region13: #{tpu_custom_call.1} parent=1 // pred_fallthru
      _
    // Predicated region
    $region14: #{tpu_custom_call.1} parent=1 // pred_check
      _
    $region15: #{tpu_custom_call.1} parent=1 // pred_check_branch
      %31 = sbr.rel (0) target = $region17
    $region16: #{tpu_custom_call.1} parent=1 // pred_region
      _
    $region17: #{tpu_custom_call.1} parent=1 // pred_fallthru
      _
    // Predicated region
    $region18: #{tpu_custom_call.1} parent=1 // pred_check
      _
    $region19: #{tpu_custom_call.1} parent=1 // pred_check_branch
      %33 = sbr.rel (0) target = $region21
    $region20: #{tpu_custom_call.1} parent=1 // pred_region
      _
    $region21: #{tpu_custom_call.1} parent=1 // pred_fallthru
      _
    // Predicated region
    $region22: #{tpu_custom_call.1} parent=1 // pred_check
      _
    $region23: #{tpu_custom_call.1} parent=1 // pred_check_branch
      %35 = sbr.rel (0) target = $region25
    $region24: #{tpu_custom_call.1} parent=1 // pred_region
      %36 = dma.done [#allocation4], 2048
    $region25: #{tpu_custom_call.1} parent=1 // pred_fallthru
      _
    %v37 = vld [vmem:[%s1] sm:$0xff]
    %v38 = vld [vmem:[%s1 + $0x8] sm:$0xff]
    %v39 = vld [vmem:[%s1 + $0x10] sm:$0xf]
    %v40 = vld [vmem:[#allocation3] sm:$0xff]
    %v41 = vld [vmem:[#allocation3 + $0x8] sm:$0xff]
    %v42 = vld [vmem:[#allocation3 + $0x10] sm:$0xff]
    %v43 = vld [vmem:[#allocation3 + $0x18] sm:$0xff]
    %v44 = vld [vmem:[#allocation3 + $0x20] sm:$0xff]
    %v45 = vld [vmem:[#allocation3 + $0x28] sm:$0xff]
    %v46 = vld [vmem:[#allocation3 + $0x30] sm:$0xff]
    %v47 = vld [vmem:[#allocation3 + $0x38] sm:$0xff]
    %v48 = vld [vmem:[#allocation3 + $0x40] sm:$0xff]
    %v49 = vld [vmem:[#allocation3 + $0x48] sm:$0xff]
    %v50 = vld [vmem:[#allocation3 + $0x50] sm:$0xff]
    %v51 = vld [vmem:[#allocation3 + $0x58] sm:$0xff]
    %v52 = vld [vmem:[#allocation3 + $0x60] sm:$0xff]
    %v53 = vld [vmem:[#allocation3 + $0x68] sm:$0xff]
    %v54 = vld [vmem:[#allocation3 + $0x70] sm:$0xff]
    %v55 = vld [vmem:[#allocation3 + $0x78] sm:$0xff]
    %v56 = vld [vmem:[%s2] sm:$0xff]
    %v57 = vld [vmem:[%s2 + $0x8] sm:$0xff]
    %v58 = vld [vmem:[%s2 + $0x10] sm:$0xf]
    %60 = vset.pattern.permute.xlu0 0
    %61 = vperm.xlu0 %60, %v56
    %v62 = vpop.permute.xlu0 %61
    %65 = vset.pattern.permute.xlu0 0
    %66 = vperm.xlu0 %65, %v57
    %v67 = vpop.permute.xlu0 %66
    %70 = vset.pattern.permute.xlu0 0
    %71 = vperm.xlu0 %70, %v58
    %v72 = vpop.permute.xlu0 %71
    %vm74 = vcmask 261120
    %v76 = vsel %vm74, %v37, 0
    %v79 = vsel %vm74, %v38, 0
    %v82 = vsel %vm74, %v39, 0
    %v85 = vsel %vm74, %v40, 0
    %v88 = vsel %vm74, %v41, 0
    %v91 = vsel %vm74, %v42, 0
    %v94 = vsel %vm74, %v43, 0
    %v97 = vsel %vm74, %v44, 0
    %v100 = vsel %vm74, %v45, 0
    %v103 = vsel %vm74, %v46, 0
    %v106 = vsel %vm74, %v47, 0
    %v109 = vsel %vm74, %v48, 0
    %v112 = vsel %vm74, %v49, 0
    %v115 = vsel %vm74, %v50, 0
    %v118 = vsel %vm74, %v51, 0
    %v121 = vsel %vm74, %v52, 0
    %v124 = vsel %vm74, %v53, 0
    %v127 = vsel %vm74, %v54, 0
    %v130 = vsel %vm74, %v55, 0
    %132 = vmatprep.subr.mxu0 0.0
    %133 = vmatpush1.xpose.msra.mxu0 %v130
    %134 = vmatprep.subr.mxu0 0.0
    %135 = vmatpush1.xpose.msra.mxu0 %v127
    %136 = vmatprep.subr.mxu0 0.0
    %137 = vmatpush1.xpose.msra.mxu0 %v124
    %138 = vmatprep.subr.mxu0 0.0
    %139 = vmatpush1.xpose.msra.mxu0 %v121
    %140 = vmatprep.subr.mxu0 0.0
    %141 = vmatpush1.xpose.msra.mxu0 %v118
    %142 = vmatprep.subr.mxu0 0.0
    %143 = vmatpush1.xpose.msra.mxu0 %v115
    %144 = vmatprep.subr.mxu0 0.0
    %145 = vmatpush1.xpose.msra.mxu0 %v112
    %146 = vmatprep.subr.mxu0 0.0
    %147 = vmatpush1.xpose.msra.mxu0 %v109
    %148 = vmatprep.subr.mxu0 0.0
    %149 = vmatpush1.xpose.msra.mxu0 %v106
    %150 = vmatprep.subr.mxu0 0.0
    %151 = vmatpush1.xpose.msra.mxu0 %v103
    %152 = vmatprep.subr.mxu0 0.0
    %153 = vmatpush1.xpose.msra.mxu0 %v100
    %154 = vmatprep.subr.mxu0 0.0
    %155 = vmatpush1.xpose.msra.mxu0 %v97
    %156 = vmatprep.subr.mxu0 0.0
    %157 = vmatpush1.xpose.msra.mxu0 %v94
    %158 = vmatprep.subr.mxu0 0.0
    %159 = vmatpush1.xpose.msra.mxu0 %v91
    %160 = vmatprep.subr.mxu0 0.0
    %161 = vmatpush1.xpose.msra.mxu0 %v88
    %162 = vmatprep.subr.mxu0 0.0
    %163 = vmatpush1.xpose.msra.mxu0 %v85
    %164 = vmatprep.subr.mxu0 0.0
    %165 = vmatpush2.xpose.msra.mxu0 0.0
    %166 = vmatprep.subr.mxu0 0.0
    %167 = vmatpush2.xpose.msra.mxu0 0.0
    %168 = vmatprep.subr.mxu0 0.0
    %169 = vmatpush2.xpose.msra.mxu0 0.0
    %170 = vmatprep.subr.mxu0 0.0
    %171 = vmatpush2.xpose.msra.mxu0 0.0
    %172 = vmatprep.subr.mxu0 0.0
    %173 = vmatpush2.xpose.msra.mxu0 0.0
    %174 = vmatprep.subr.mxu0 0.0
    %175 = vmatpush2.xpose.msra.mxu0 0.0
    %176 = vmatprep.subr.mxu0 0.0
    %177 = vmatpush2.xpose.msra.mxu0 0.0
    %178 = vmatprep.subr.mxu0 0.0
    %179 = vmatpush2.xpose.msra.mxu0 0.0
    %180 = vmatprep.subr.mxu0 0.0
    %181 = vmatpush2.xpose.msra.mxu0 0.0
    %182 = vmatprep.subr.mxu0 0.0
    %183 = vmatpush2.xpose.msra.mxu0 0.0
    %184 = vmatprep.subr.mxu0 0.0
    %185 = vmatpush2.xpose.msra.mxu0 0.0
    %186 = vmatprep.subr.mxu0 0.0
    %187 = vmatpush2.xpose.msra.mxu0 0.0
    %188 = vmatprep.subr.mxu0 0.0
    %189 = vmatpush2.xpose.msra.mxu0 0.0
    %190 = vmatprep.subr.mxu0 0.0
    %191 = vmatpush2.xpose.msra.mxu0 0.0
    %192 = vmatprep.subr.mxu0 0.0
    %193 = vmatpush2.xpose.msra.mxu0 0.0
    %194 = vmatprep.subr.mxu0 0.0
    %195 = vmatpush2.xpose.msra.mxu0 0.0
    %196 = vmatprep.mubr.f32.mxu0 0.0
    %197 = vmatmul.mubr.f32.gmra.mxu0 %v76
    %v198 = vpop.f32.mrf.mxu0
    %v199 = vadd.f32 %v62, %v198
    %v200 = vpop.f32.mrf.mxu0
    %201 = vmatprep.mubr.f32.mxu0 0.0
    %202 = vmatmul.mubr.f32.gmra.mxu0 %v79
    %v203 = vpop.f32.mrf.mxu0
    %v204 = vadd.f32 %v67, %v203
    %v205 = vpop.f32.mrf.mxu0
    %206 = vmatprep.mubr.f32.mxu0 0.0
    %207 = vmatmul.mubr.f32.gmra.mxu0 %v82
    %v208 = vpop.f32.mrf.mxu0
    %v209 = vadd.f32 %v72, %v208
    %v210 = vpop.f32.mrf.mxu0
    %211 = vdwg.mxu0
    %vm212 = vcmp.gt.f32.partialorder %v199, 0.0
    %vm213 = vcmp.gt.f32.partialorder %v204, 0.0
    %vm214 = vcmp.gt.f32.partialorder %v209, 0.0
    %v215 = vmul.f32 %v199, 0.01
    %v216 = vmul.f32 %v204, 0.01
    %v217 = vmul.f32 %v209, 0.01
    %v218 = vsel %vm212, %v199, %v215
    %v219 = vsel %vm213, %v204, %v216
    %v220 = vsel %vm214, %v209, %v217
    %v221 = vld [vmem:[%s3] sm:$0x1]
    %v222 = vld [vmem:[#allocation2] sm:$0x1]
    %224 = vset.pattern.permute.xlu0 0
    %225 = vperm.xlu0 %224, %v222
    %v226 = vpop.permute.xlu0 %225
    %v228 = vlaneseq
    %v229 = vshrl.u32 %v228, 7
    %v230 = vsub.s32 0, %v229
    %v231 = vrot.slane %v226, %v230
    %vm232 = vcmask 162816
    %v234 = vsel %vm232, %v221, 0
    %vm236 = vcmask 1043456
    %v238 = vsel %vm236, %v220, 0
    %240 = vmatprep.subr.mxu0 0.0
    %241 = vmatpush1.msra.mxu0 0.0
    %242 = vmatprep.subr.mxu0 0.0
    %243 = vmatpush1.msra.mxu0 0.0
    %244 = vmatprep.subr.mxu0 0.0
    %245 = vmatpush1.msra.mxu0 0.0
    %246 = vmatprep.subr.mxu0 0.0
    %247 = vmatpush1.msra.mxu0 0.0
    %248 = vmatprep.subr.mxu0 0.0
    %249 = vmatpush1.msra.mxu0 0.0
    %250 = vmatprep.subr.mxu0 0.0
    %251 = vmatpush1.msra.mxu0 0.0
    %252 = vmatprep.subr.mxu0 0.0
    %253 = vmatpush1.msra.mxu0 0.0
    %254 = vmatprep.subr.mxu0 0.0
    %255 = vmatpush1.msra.mxu0 0.0
    %256 = vmatprep.subr.mxu0 0.0
    %257 = vmatpush1.msra.mxu0 0.0
    %258 = vmatprep.subr.mxu0 0.0
    %259 = vmatpush1.msra.mxu0 0.0
    %260 = vmatprep.subr.mxu0 0.0
    %261 = vmatpush1.msra.mxu0 0.0
    %262 = vmatprep.subr.mxu0 0.0
    %263 = vmatpush1.msra.mxu0 0.0
    %264 = vmatprep.subr.mxu0 0.0
    %265 = vmatpush1.msra.mxu0 0.0
    %266 = vmatprep.subr.mxu0 0.0
    %267 = vmatpush1.msra.mxu0 %v238
    %268 = vmatprep.subr.mxu0 0.0
    %269 = vmatpush1.msra.mxu0 %v219
    %270 = vmatprep.subr.mxu0 0.0
    %271 = vmatpush1.msra.mxu0 %v218
    %272 = vmatprep.subr.mxu0 0.0
    %273 = vmatpush2.msra.mxu0 0.0
    %274 = vmatprep.subr.mxu0 0.0
    %275 = vmatpush2.msra.mxu0 0.0
    %276 = vmatprep.subr.mxu0 0.0
    %277 = vmatpush2.msra.mxu0 0.0
    %278 = vmatprep.subr.mxu0 0.0
    %279 = vmatpush2.msra.mxu0 0.0
    %280 = vmatprep.subr.mxu0 0.0
    %281 = vmatpush2.msra.mxu0 0.0
    %282 = vmatprep.subr.mxu0 0.0
    %283 = vmatpush2.msra.mxu0 0.0
    %284 = vmatprep.subr.mxu0 0.0
    %285 = vmatpush2.msra.mxu0 0.0
    %286 = vmatprep.subr.mxu0 0.0
    %287 = vmatpush2.msra.mxu0 0.0
    %288 = vmatprep.subr.mxu0 0.0
    %289 = vmatpush2.msra.mxu0 0.0
    %290 = vmatprep.subr.mxu0 0.0
    %291 = vmatpush2.msra.mxu0 0.0
    %292 = vmatprep.subr.mxu0 0.0
    %293 = vmatpush2.msra.mxu0 0.0
    %294 = vmatprep.subr.mxu0 0.0
    %295 = vmatpush2.msra.mxu0 0.0
    %296 = vmatprep.subr.mxu0 0.0
    %297 = vmatpush2.msra.mxu0 0.0
    %298 = vmatprep.subr.mxu0 0.0
    %299 = vmatpush2.msra.mxu0 0.0
    %300 = vmatprep.subr.mxu0 0.0
    %301 = vmatpush2.msra.mxu0 0.0
    %302 = vmatprep.subr.mxu0 0.0
    %303 = vmatpush2.msra.mxu0 0.0
    %304 = vmatprep.mubr.f32.mxu0 0.0
    %305 = vmatmul.mubr.f32.gmra.mxu0 %v234
    %v306 = vpop.f32.mrf.mxu0
    %v307 = vadd.f32 %v231, %v306
    %v308 = vpop.f32.mrf.mxu0
    %309 = vdwg.mxu0
    %v310 = vxor.u32 %v307, 2147483648
    %v311 = vmul.f32 %v310, 1.442695
    %v312 = vpow.pop %v311
    %v313 = vadd.f32 %v312, 1.0
    %v314 = vrcp.pop %v313
    %v315 = vmul.f32 1.0, %v314
    %316 = vst [vmem:[#allocation6] sm:$0x1] %v315
    // Predicated region
    $region26: #{tpu_custom_call.1} parent=1 // pred_check
      _
    $region27: #{tpu_custom_call.1} parent=1 // pred_check_branch
      %318 = sbr.rel (0) target = $region29
    $region28: #{tpu_custom_call.1} parent=1 // pred_region
      %s320 = ssub.s32 16, 16
      %321 = vsyncadd [#allocation5], %s320
      %s323 = sshll.u32 [#allocation6], 4
      %s324 = int_to_ptr.vmem [resolvable:$true] %s323
      %326 = dma.vmem_to_hbm [thread:$0]  %s324, 16, %s5, [#allocation5]
    $region29: #{tpu_custom_call.1} parent=1 // pred_fallthru
      _
    // Predicated region
    $region30: #{tpu_custom_call.1} parent=1 // pred_check
      _
    $region31: #{tpu_custom_call.1} parent=1 // pred_check_branch
      %328 = sbr.rel (0) target = $region33
    $region32: #{tpu_custom_call.1} parent=1 // pred_region
      %329 = dma.done [#allocation5], 16
    $region33: #{tpu_custom_call.1} parent=1 // pred_fallthru
      _
    %330 = vsyncpa [#allocation4], 1
    %331 = vsyncpa [#allocation5], 1

</llo_original>
